<compile_context>
chip_gen: v7x
topology: tpu7x:2x2x1
jax: 0.10.0
libtpu: 0.0.40
codegen_flags: <defaults>
</compile_context>

<pallas_src>
import functools

import jax
import jax.numpy as jnp
from jax import lax
from jax.experimental import pallas as pl
from jax.experimental.pallas import tpu as pltpu


# Contract the last dim of both operands: F @ F^T without materializing F^T.
_CONTRACT_LAST = (((1,), (1,)), ((), ()))

# Cast F tiles to bf16 on the MXU only when the gram is large enough to be
# compute-bound (review: N*C >= ~512); below that the kernel is HBM-bound and
# the extra precision is free.
_BF16_MIN_NC = 512


# ---------------------------------------------------------------------------
# Kernels
# ---------------------------------------------------------------------------
def _partial_gram_kernel(f_ref, g_ref, acc_ref, *, inv_norm, cast_bf16):
    """Accumulate one per-split partial gram over the K ("arbitrary") axis."""
    k = pl.program_id(1)

    @pl.when(k == 0)
    def _():
        acc_ref[...] = jnp.zeros_like(acc_ref)

    f = f_ref[...]
    if cast_bf16:
        # bf16 MXU feed; accumulation stays f32 via preferred_element_type.
        f = f.astype(jnp.bfloat16)
    # NOTE: default matmul precision (multi-pass bf16 emulation for f32).  Use
    # precision=lax.Precision.HIGHEST here if bitwise-close fp32 is required.
    acc_ref[...] += lax.dot_general(
        f, f, dimension_numbers=_CONTRACT_LAST,
        preferred_element_type=jnp.float32)

    @pl.when(k == pl.num_programs(1) - 1)
    def _():
        g_ref[0] = acc_ref[...] * inv_norm


def _style_mse_kernel(gp_ref, tgt_ref, loss_ref, *, inv_count):
    """Combine per-core partial grams and emit mse_loss(G, target) scalar."""
    g = jnp.sum(gp_ref[...], axis=0)
    d = g - tgt_ref[...].astype(jnp.float32)
    loss_ref[0, 0] = jnp.sum(d * d) * inv_count


# ---------------------------------------------------------------------------
# Tile planning
# ---------------------------------------------------------------------------
def _round_up(x, m):
    return (x + m - 1) // m * m


def _vmem_capacity_bytes():
    """Per-core VMEM capacity; conservative 64 MiB (v7x-sized) fallback."""
    try:
        cap = getattr(pltpu.get_tpu_info(), "vmem_capacity_bytes", None)
        if cap:
            return int(cap)
    except Exception:
        pass
    return 64 << 20


def _plan(nc, hw, itemsize):
    """Pick (tk, hw_pad, kt_per_split, splits, vmem_limit) for the gram kernel.

    - K tile is a multiple of 128 sized from the chip's VMEM (double-buffered
      F tiles + f32 accumulator + partial-gram output must fit vmem_limit).
    - hw is padded up to a whole number of K tiles (zeros don't change F F^T).
    - The reduction is split 2-way along a leading "parallel" axis whenever the
      tile count allows it (2x on v7x's two TensorCores, harmless elsewhere).
    """
    cap = _vmem_capacity_bytes()
    vmem_limit = min(cap * 3 // 4, 100 << 20)          # 48 MiB on v7x, 96 MiB on v5e/v6e
    fixed = 3 * nc * nc * 4 + (2 << 20)                 # acc + 2x out buffers + slack
    per_buf = max((vmem_limit - fixed) // 2, nc * 128 * itemsize)
    tk = max((per_buf // max(nc * itemsize, 1)) // 128 * 128, 128)
    tk = min(tk, _round_up(hw, 128))
    hw_pad = _round_up(hw, tk)
    kt = hw_pad // tk
    splits = 2 if (kt >= 2 and kt % 2 == 0) else 1
    usage = 2 * nc * tk * itemsize + fixed
    vmem_limit = int(min(max(vmem_limit, usage), cap))
    return tk, hw_pad, kt // splits, splits, vmem_limit


# ---------------------------------------------------------------------------
# Wrappers
# ---------------------------------------------------------------------------
def _partial_grams(x):
    """(splits, nc, nc) f32 partial grams of NCHW features, each *1/(nc*hw)."""
    n, c, h, w = x.shape
    nc, hw = n * c, h * w
    f = x.reshape(nc, hw)                      # native dtype, no forced upcast
    inv_norm = 1.0 / float(nc * hw)
    tk, hw_pad, kt_per, splits, vmem_limit = _plan(nc, hw, f.dtype.itemsize)
    if hw_pad != hw:
        f = jnp.pad(f, ((0, 0), (0, hw_pad - hw)))     # zero cols: gram unchanged
    cast_bf16 = (f.dtype == jnp.float32) and (nc >= _BF16_MIN_NC)

    cost = pl.CostEstimate(
        flops=2 * nc * nc * hw_pad,
        bytes_accessed=nc * hw_pad * f.dtype.itemsize + splits * nc * nc * 4,
        transcendentals=0)

    return pl.pallas_call(
        functools.partial(_partial_gram_kernel, inv_norm=inv_norm,
                          cast_bf16=cast_bf16),
        out_shape=jax.ShapeDtypeStruct((splits, nc, nc), jnp.float32),
        grid=(splits, kt_per),
        in_specs=[pl.BlockSpec((nc, tk),
                               lambda s, k: (0, s * kt_per + k))],
        out_specs=pl.BlockSpec((1, nc, nc), lambda s, k: (s, 0, 0)),
        scratch_shapes=[pltpu.VMEM((nc, nc), jnp.float32)],
        compiler_params=pltpu.CompilerParams(
            dimension_semantics=("parallel", "arbitrary"),
            vmem_limit_bytes=vmem_limit),
        cost_estimate=cost,
    )(f)


def gram_matrix(x):
    """Gram matrix of an NCHW tensor: (N*C, N*C) f32, normalized by N*C*H*W."""
    partials = _partial_grams(x)
    return jnp.sum(partials, axis=0)


def style_loss_forward(x, target_gram):
    """Returns (input unchanged, mse_loss(gram(input), target_gram))."""
    n, c, _, _ = x.shape
    nc = n * c
    inv_count = 1.0 / float(nc * nc)
    partials = _partial_grams(x)

    loss = pl.pallas_call(
        functools.partial(_style_mse_kernel, inv_count=inv_count),
        out_shape=jax.ShapeDtypeStruct((1, 1), jnp.float32),
        in_specs=[pl.BlockSpec(memory_space=pltpu.MemorySpace.VMEM),
                  pl.BlockSpec(memory_space=pltpu.MemorySpace.VMEM)],
        out_specs=pl.BlockSpec(memory_space=pltpu.MemorySpace.SMEM),
    )(partials, target_gram)
    return x, loss[0, 0]


class StyleLoss:
    """JAX/Pallas port of the PyTorch StyleLoss module."""

    def __init__(self, target_feature):
        # Target gram is "detached" (a constant) — computed once at init.
        self.target = gram_matrix(target_feature)
        self.loss = None

    def __call__(self, x):
        # TODO(synk): self.loss as a Python attribute is host-side state; call
        # style_loss_forward directly when composing with jit/grad.
        out, loss = style_loss_forward(x, self.target)
        self.loss = loss
        return out


# ---------------------------------------------------------------------------
# Main
# ---------------------------------------------------------------------------
if __name__ == "__main__":
    key = jax.random.PRNGKey(0)
    k_tgt, k_in = jax.random.split(key)

    # Small NCHW feature maps (batch=2, channels=4, spatial=16x16).
    target_feature = jax.random.normal(k_tgt, (2, 4, 16, 16), dtype=jnp.float32)
    x = jax.random.normal(k_in, (2, 4, 16, 16), dtype=jnp.float32)

    style_loss = StyleLoss(target_feature)
    out = jax.block_until_ready(style_loss(x))
    loss = jax.block_until_ready(style_loss.loss)

    # Pure-JAX reference.
    def ref_gram(t):
        n, c, h, w = t.shape
        f = t.reshape(n * c, h * w)
        return (f @ f.T) / (n * c * h * w)

    ref_loss = jnp.mean((ref_gram(x) - ref_gram(target_feature)) ** 2)
    assert jnp.allclose(out, x), "forward must return its input unchanged"
    # Tolerance accounts for MXU f32 emulation differences vs. XLA's default.
    assert jnp.allclose(loss, ref_loss, rtol=5e-3, atol=1e-6), (loss, ref_loss)

    # Unaligned spatial size (10x10 -> hw=100) exercises the zero-padding path.
    tgt2 = jax.random.normal(jax.random.PRNGKey(1), (2, 4, 10, 10), jnp.float32)
    x2 = jax.random.normal(jax.random.PRNGKey(2), (2, 4, 10, 10), jnp.float32)
    sl2 = StyleLoss(tgt2)
    out2 = jax.block_until_ready(sl2(x2))
    loss2 = jax.block_until_ready(sl2.loss)
    ref_loss2 = jnp.mean((ref_gram(x2) - ref_gram(tgt2)) ** 2)
    assert jnp.allclose(out2, x2), "forward must return its input unchanged"
    assert jnp.allclose(loss2, ref_loss2, rtol=5e-3, atol=1e-6), (loss2, ref_loss2)

    print("KERNEL_OK")
</pallas_src>

<mosaic_0001>
module attributes {stable_mosaic.version = 11 : i64} {
  func.func @_partial_gram_kernel(%arg0: i32, %arg1: i32, %arg2: memref<8x256xf32, #tpu.memory_space<vmem>>, %arg3: memref<1x8x8xf32, #tpu.memory_space<vmem>>, %arg4: memref<8x8xf32, #tpu.memory_space<vmem>>) attributes {dimension_semantics = [#tpu.dimension_semantics<parallel>, #tpu.dimension_semantics<arbitrary>], iteration_bounds = array<i64: 1, 1>, scalar_prefetch = 0 : i64, scratch_operands = 1 : i64, tpu.core_type = #tpu.core_type<tc>, window_params = [{transform_indices = @transform_0, window_bounds = array<i64: 8, 256>}, {transform_indices = @transform_1, window_bounds = array<i64: 1, 8, 8>}]} {
    %c0_i32 = arith.constant 0 : i32
    %0 = arith.cmpi eq, %arg1, %c0_i32 : i32
    %1 = arith.extui %0 : i1 to i32
    %c0_i32_0 = arith.constant 0 : i32
    %2 = arith.cmpi ne, %1, %c0_i32_0 : i32
    scf.if %2 {
      %cst_8 = arith.constant 0.000000e+00 : f32
      %11 = vector.broadcast %cst_8 : f32 to vector<8x8xf32>
      %c0_9 = arith.constant 0 : index
      %c0_10 = arith.constant 0 : index
      %12 = vector.load %arg4[%c0_9, %c0_10] : memref<8x8xf32, #tpu.memory_space<vmem>>, vector<8x8xf32>
      tpu.vector_store %arg4[%c0_9, %c0_10], %11 {strides = array<i32>} : memref<8x8xf32, #tpu.memory_space<vmem>>, vector<8x8xf32>,
    } else {
    }
    %c0 = arith.constant 0 : index
    %c0_1 = arith.constant 0 : index
    %3 = vector.load %arg2[%c0, %c0_1] : memref<8x256xf32, #tpu.memory_space<vmem>>, vector<8x256xf32>
    %c0_2 = arith.constant 0 : index
    %c0_3 = arith.constant 0 : index
    %4 = vector.load %arg4[%c0_2, %c0_3] : memref<8x8xf32, #tpu.memory_space<vmem>>, vector<8x8xf32>
    %cst = arith.constant dense<0.000000e+00> : vector<8x8xf32>
    %5 = tpu.matmul %3, %3, %cst {dimension_numbers = #tpu.dot_dimension_numbers<[1], [1], [0], [0], [0, 0, 1, 0], [], []>} : vector<8x256xf32>, vector<8x256xf32>, vector<8x8xf32> -> vector<8x8xf32>
    %6 = arith.addf %4, %5 : vector<8x8xf32>
    %c0_4 = arith.constant 0 : index
    %c0_5 = arith.constant 0 : index
    %7 = vector.load %arg4[%c0_4, %c0_5] : memref<8x8xf32, #tpu.memory_space<vmem>>, vector<8x8xf32>
    tpu.vector_store %arg4[%c0_4, %c0_5], %6 {strides = array<i32>} : memref<8x8xf32, #tpu.memory_space<vmem>>, vector<8x8xf32>,
    %c0_i32_6 = arith.constant 0 : i32
    %8 = arith.cmpi eq, %arg1, %c0_i32_6 : i32
    %9 = arith.extui %8 : i1 to i32
    %c0_i32_7 = arith.constant 0 : i32
    %10 = arith.cmpi ne, %9, %c0_i32_7 : i32
    scf.if %10 {
      %c0_8 = arith.constant 0 : index
      %c0_9 = arith.constant 0 : index
      %11 = vector.load %arg4[%c0_8, %c0_9] : memref<8x8xf32, #tpu.memory_space<vmem>>, vector<8x8xf32>
      %cst_10 = arith.constant 4.8828125E-4 : f32
      %12 = vector.broadcast %cst_10 : f32 to vector<8x8xf32>
      %13 = arith.mulf %11, %12 : vector<8x8xf32>
      %c0_11 = arith.constant 0 : index
      %c0_12 = arith.constant 0 : index
      %c0_13 = arith.constant 0 : index
      %14 = vector.load %arg3[%c0_11, %c0_12, %c0_13] : memref<1x8x8xf32, #tpu.memory_space<vmem>>, vector<1x8x8xf32>
      %15 = vector.shape_cast %14 : vector<1x8x8xf32> to vector<8x8xf32>
      %16 = vector.shape_cast %13 : vector<8x8xf32> to vector<1x8x8xf32>
      tpu.vector_store %arg3[%c0_11, %c0_12, %c0_13], %16 {strides = array<i32>} : memref<1x8x8xf32, #tpu.memory_space<vmem>>, vector<1x8x8xf32>,
    } else {
    }
    return
  }
  func.func @transform_0(%arg0: i32, %arg1: i32) -> (i32, i32) {
    %c1_i32 = arith.constant 1 : i32
    %0 = arith.muli %arg0, %c1_i32 : i32
    %1 = arith.addi %0, %arg1 : i32
    %c0_i32 = arith.constant 0 : i32
    %c0_i32_0 = arith.constant 0 : i32
    return %c0_i32, %1 : i32, i32
  }
  func.func @transform_1(%arg0: i32, %arg1: i32) -> (i32, i32, i32) {
    %c0_i32 = arith.constant 0 : i32
    %c0_i32_0 = arith.constant 0 : i32
    %c0_i32_1 = arith.constant 0 : i32
    return %arg0, %c0_i32, %c0_i32_0 : i32, i32, i32
  }
}

</mosaic_0001>

<llo_original>
// kernel: tpu_custom_call.1
$region0: #{tpu_custom_call.1}
  #allocation0 [shape = 'u32[]', space=smem, size = 0x4, offset = 0x4, fixed_abs, tag = 'smem constant byte address 0x4 - core index']
  #allocation1 [shape = 'u32[144,128]{1,0:T(1,128)}', space=vmem, size = 0x12000, scoped, tag = 'internal scratch']
  #allocation2 [shape = 'f32[8,8]{1,0:T(8,128)}', space=vmem, size = 0x1000, scoped, tag = 'scratch operand']
  %s0 = inlined_call_operand.hbm [shape: f32[8,256], index: 0, kind: input, shape index: {}]
  %s1 = inlined_call_operand.hbm [shape: f32[1,8,8], index: 1, kind: output, shape index: {}]
  %s2 = sld [smem:[#allocation0]]
  $region26: #{tpu_custom_call.1} parent=0
    _
  %s4 = ssub.s32 1, %s2
  %s5 = scalar_select 0, %s4, %s2
  $region1: #{tpu_custom_call.1} parent=0
    #allocation3 [shape = 'u8[8192]{0}', space=vmem, size = 0x2000, scoped, tag = 'input window, operand 0, single buffered']
    #allocation4 [shape = 's32[1]{0}', space=sflag, size = 0x4, scoped, tag = 'scoped memory for tpu_custom_call.1']
    #allocation5 [shape = 's32[1]{0}', space=sflag, size = 0x4, scoped, tag = 'scoped memory for tpu_custom_call.1']
    #allocation6 [shape = 'u8[4096]{0}', space=vmem, size = 0x1000, scoped, tag = 'output window, operand 0, single buffered']
    %6 = vsyncpa [#allocation4], 0
    %7 = vsyncpa [#allocation5], 0
    // Predicated region
    $region2: #{tpu_custom_call.1} parent=1 // pred_check
      _
    $region3: #{tpu_custom_call.1} parent=1 // pred_check_branch
      %9 = sbr.rel (0) target = $region5
    $region4: #{tpu_custom_call.1} parent=1 // pred_region
      %s10 = sadd.s32 0, 0
      %s11 = smul.u32 2, %s10
      %s13 = ssub.s32 256, 256
      %14 = vsyncadd [#allocation4], %s13
      %s15 = smul.addr %s11, 128
      %s16 = scalar_lea.hbm %s0, %s15
      %s18 = sshll.u32 [#allocation3], 4
      %s19 = int_to_ptr.vmem [resolvable:$true] %s18
      %21 = dma.hbm_to_vmem [thread:$0]  %s16, 256, %s19, [#allocation4]
    $region5: #{tpu_custom_call.1} parent=1 // pred_fallthru
      _
    // Predicated region
    $region6: #{tpu_custom_call.1} parent=1 // pred_check
      _
    $region7: #{tpu_custom_call.1} parent=1 // pred_check_branch
      %23 = sbr.rel (0) target = $region9
    $region8: #{tpu_custom_call.1} parent=1 // pred_region
      %24 = dma.done [#allocation4], 256
    $region9: #{tpu_custom_call.1} parent=1 // pred_fallthru
      _
    %s25 = sadd.s32 0, 0
    %s26 = smul.u32 2, %s25
    %p27 = scmp.eq.s32.totalorder 0, 0
    // Predicated region
    $region10: #{tpu_custom_call.1} parent=1 // pred_check
      %p28 = pneg %p27
    $region11: #{tpu_custom_call.1} parent=1 // pred_check_branch
      %30 = sbr.rel (%p28) target = $region13
    $region12: #{tpu_custom_call.1} parent=1 // pred_region
      %vm31 = vcmask 64512
      %32 = vst.msk [vmem:[#allocation2] sm:$0xff] %vm31, 0.0
    $region13: #{tpu_custom_call.1} parent=1 // pred_fallthru
      _
    %v33 = vld [vmem:[#allocation3] sm:$0xff]
    %v34 = vld [vmem:[#allocation3 + $0x8] sm:$0xff]
    %v35 = vld [vmem:[#allocation2] sm:$0xff]
    %36 = vmatprep.subr.mxu0 %v34
    %37 = vmatpush1.xpose.msra.mxu0 %v33
    %38 = vmatprep.subr.mxu0 0.0
    %39 = vmatpush1.xpose.msra.mxu0 0.0
    %40 = vmatprep.subr.mxu0 0.0
    %41 = vmatpush1.xpose.msra.mxu0 0.0
    %42 = vmatprep.subr.mxu0 0.0
    %43 = vmatpush1.xpose.msra.mxu0 0.0
    %44 = vmatprep.subr.mxu0 0.0
    %45 = vmatpush1.xpose.msra.mxu0 0.0
    %46 = vmatprep.subr.mxu0 0.0
    %47 = vmatpush1.xpose.msra.mxu0 0.0
    %48 = vmatprep.subr.mxu0 0.0
    %49 = vmatpush1.xpose.msra.mxu0 0.0
    %50 = vmatprep.subr.mxu0 0.0
    %51 = vmatpush1.xpose.msra.mxu0 0.0
    %52 = vmatprep.subr.mxu0 0.0
    %53 = vmatpush1.xpose.msra.mxu0 0.0
    %54 = vmatprep.subr.mxu0 0.0
    %55 = vmatpush1.xpose.msra.mxu0 0.0
    %56 = vmatprep.subr.mxu0 0.0
    %57 = vmatpush1.xpose.msra.mxu0 0.0
    %58 = vmatprep.subr.mxu0 0.0
    %59 = vmatpush1.xpose.msra.mxu0 0.0
    %60 = vmatprep.subr.mxu0 0.0
    %61 = vmatpush1.xpose.msra.mxu0 0.0
    %62 = vmatprep.subr.mxu0 0.0
    %63 = vmatpush1.xpose.msra.mxu0 0.0
    %64 = vmatprep.subr.mxu0 0.0
    %65 = vmatpush1.xpose.msra.mxu0 0.0
    %66 = vmatprep.subr.mxu0 0.0
    %67 = vmatpush1.xpose.msra.mxu0 0.0
    %68 = vmatprep.subr.mxu0 0.0
    %69 = vmatpush1.xpose.msra.mxu0 0.0
    %70 = vmatprep.subr.mxu0 0.0
    %71 = vmatpush1.xpose.msra.mxu0 0.0
    %72 = vmatprep.subr.mxu0 0.0
    %73 = vmatpush1.xpose.msra.mxu0 0.0
    %74 = vmatprep.subr.mxu0 0.0
    %75 = vmatpush1.xpose.msra.mxu0 0.0
    %76 = vmatprep.subr.mxu0 0.0
    %77 = vmatpush1.xpose.msra.mxu0 0.0
    %78 = vmatprep.subr.mxu0 0.0
    %79 = vmatpush1.xpose.msra.mxu0 0.0
    %80 = vmatprep.subr.mxu0 0.0
    %81 = vmatpush1.xpose.msra.mxu0 0.0
    %82 = vmatprep.subr.mxu0 0.0
    %83 = vmatpush1.xpose.msra.mxu0 0.0
    %84 = vmatprep.subr.mxu0 0.0
    %85 = vmatpush1.xpose.msra.mxu0 0.0
    %86 = vmatprep.subr.mxu0 0.0
    %87 = vmatpush1.xpose.msra.mxu0 0.0
    %88 = vmatprep.subr.mxu0 0.0
    %89 = vmatpush1.xpose.msra.mxu0 0.0
    %90 = vmatprep.subr.mxu0 0.0
    %91 = vmatpush1.xpose.msra.mxu0 0.0
    %92 = vmatprep.subr.mxu0 0.0
    %93 = vmatpush1.xpose.msra.mxu0 0.0
    %94 = vmatprep.subr.mxu0 0.0
    %95 = vmatpush1.xpose.msra.mxu0 0.0
    %96 = vmatprep.subr.mxu0 0.0
    %97 = vmatpush1.xpose.msra.mxu0 0.0
    %98 = vmatprep.subr.mxu0 0.0
    %99 = vmatpush1.xpose.msra.mxu0 0.0
    %100 = vmatprep.mubr.f32.mxu0 %v34
    %101 = vmatmul.mubr.f32.gmra.mrb[0].mxu0 %v33
    %v102 = vpop.f32.mrb[0].mxu0
    %v103 = vadd.f32 0.0, %v102
    %v104 = vpop.f32.mrb[0].mxu0
    %105 = vdwg.mxu0
    %v106 = vadd.f32 %v35, %v103
    %vm107 = vcmask 64512
    %108 = vst.msk [vmem:[#allocation2] sm:$0xff] %vm107, %v106
    // Predicated region
    $region14: #{tpu_custom_call.1} parent=1 // pred_check
      %p109 = pneg %p27
    $region15: #{tpu_custom_call.1} parent=1 // pred_check_branch
      %111 = sbr.rel (%p109) target = $region17
    $region16: #{tpu_custom_call.1} parent=1 // pred_region
      %v112 = vld [vmem:[#allocation2] sm:$0xff]
      %v113 = vmul.f32 %v112, 0.00048828125
      %114 = vst.msk [vmem:[#allocation6] sm:$0xff] %vm107, %v113
    $region17: #{tpu_custom_call.1} parent=1 // pred_fallthru
      _
    // Predicated region
    $region18: #{tpu_custom_call.1} parent=1 // pred_check
      _
    $region19: #{tpu_custom_call.1} parent=1 // pred_check_branch
      %116 = sbr.rel (0) target = $region21
    $region20: #{tpu_custom_call.1} parent=1 // pred_region
      %s118 = ssub.s32 128, 128
      %119 = vsyncadd [#allocation5], %s118
      %s121 = sshll.u32 [#allocation6], 4
      %s122 = int_to_ptr.vmem [resolvable:$true] %s121
      %124 = dma.vmem_to_hbm [thread:$0]  %s122, 128, %s1, [#allocation5]
    $region21: #{tpu_custom_call.1} parent=1 // pred_fallthru
      _
    // Predicated region
    $region22: #{tpu_custom_call.1} parent=1 // pred_check
      _
    $region23: #{tpu_custom_call.1} parent=1 // pred_check_branch
      %126 = sbr.rel (0) target = $region25
    $region24: #{tpu_custom_call.1} parent=1 // pred_region
      %127 = dma.done [#allocation5], 128
    $region25: #{tpu_custom_call.1} parent=1 // pred_fallthru
      _
    %128 = vsyncpa [#allocation4], 1
    %129 = vsyncpa [#allocation5], 1

</llo_original>
